<compile_context>
chip_gen: v5e
topology: v5e:2x2
jax: 0.10.0
libtpu: 0.0.40
codegen_flags: <defaults>
</compile_context>

<pallas_src>
import jax
import jax.numpy as jnp
import numpy as np
from jax.experimental import pallas as pl
from jax.experimental.pallas import tpu as pltpu

EPS = 1e-5
_TILE_CANDIDATES = (1024, 512, 256, 128, 64, 32, 16, 8)


# ---------------------------------------------------------------------------
# Kernels
# ---------------------------------------------------------------------------
def deconv_stats_kernel(x_ref, g_ref, r_ref):
    """Pass 1: Gram-matrix BN statistics for this tile.

    x_ref : (TM, rCin) bf16   packed input rows
    g_ref : (1, rCin, rCin)   X^T X  (f32 accumulation on the MXU)
    r_ref : (1, 1, rCin)      column sums of X
    """
    x = x_ref[...]
    # Contract the row (M) axis of both operands ("TN" matmul, same pattern as
    # flash-attention backward) — f32 accumulate, bf16 operands.
    g_ref[0] = jax.lax.dot_general(
        x, x, dimension_numbers=(((0,), (0,)), ((), ())),
        preferred_element_type=jnp.float32)
    r_ref[0] = jnp.sum(x.astype(jnp.float32), axis=0, keepdims=True)


def deconv_apply_kernel(x_ref, w_ref, scale_ref, shift_ref, y_ref):
    """Pass 2: deconv matmul + fused BN affine + ReLU.

    x_ref     : (TM, rCin) bf16
    w_ref     : (rCin, rC4) bf16   (block-diagonal packed taps)
    scale/shift: (1, rC4) f32      per-channel BN folded with batch stats
    y_ref     : (TM, rC4)          lane-dense output slab
    """
    y = jnp.dot(x_ref[...], w_ref[...], preferred_element_type=jnp.float32)
    y = y * scale_ref[...] + shift_ref[...]
    y_ref[...] = jnp.maximum(y, 0.0).astype(y_ref.dtype)


# ---------------------------------------------------------------------------
# Sizing helpers
# ---------------------------------------------------------------------------
def _cdiv(a, b):
    return -(-a // b)


def _vmem_capacity_bytes():
    """Physical per-TensorCore VMEM (generation-aware); conservative fallback."""
    try:
        cap = int(pltpu.get_tpu_info().vmem_capacity_bytes)
        if cap > 0:
            return cap
    except Exception:
        pass
    return 64 * 1024 * 1024   # v7x per-core VMEM = smallest of v5e/v6e/v7x


def _apply_tile_footprint(tm, row_in_b, row_out_b, row_f32_b, w_bytes):
    """VMEM bytes for one pass-2 grid step: double-buffered X/Y/W blocks plus
    the in-kernel f32 matmul result & epilogue temporaries."""
    return (2 * tm * (row_in_b + row_out_b) + 2 * tm * row_f32_b
            + 2 * w_bytes + (1 << 20))


def _stats_tile_footprint(tm, row_in_b, r_cin, stats_bytes):
    return 2 * tm * row_in_b + tm * r_cin * 4 + 2 * stats_bytes + (1 << 20)


def _clamp_vmem(footprint, usable):
    return int(min(usable, max(footprint + (8 << 20), 16 << 20)))


# ---------------------------------------------------------------------------
# Wrapper
# ---------------------------------------------------------------------------
def basic_deconv_up2_pallas(x, w_iokk, gamma, beta, *,
                            in_dtype=jnp.bfloat16,
                            out_dtype=jnp.float32,
                            input_format="NCHW",
                            output_format="NCHW"):
    """x: (N,Cin,H,W) [or NHWC];  w_iokk: (Cin,Cout,2,2) PyTorch ConvTranspose2d."""
    if input_format == "NCHW":
        N, Cin, H, W = x.shape
        x_nhwc = jnp.transpose(x, (0, 2, 3, 1))
    elif input_format == "NHWC":
        N, H, W, Cin = x.shape
        x_nhwc = x
    else:
        raise ValueError(f"bad input_format {input_format}")
    Cout = w_iokk.shape[1]
    C4 = 4 * Cout
    M = N * H * W

    in_b = jnp.dtype(in_dtype).itemsize
    out_b = jnp.dtype(out_dtype).itemsize

    # Flat rows (channels on lanes), bf16 to halve the X read in both passes.
    x2d = x_nhwc.reshape(M, Cin).astype(in_dtype)
    # 4 taps concatenated on lanes: col = (ky*2 + kx)*Cout + co.
    w_cat = jnp.transpose(w_iokk, (0, 2, 3, 1)).reshape(Cin, C4).astype(in_dtype)

    # ---- lane-density packing for small channel counts ----------------------
    # r consecutive pixels per packed row; block-diagonal weight keeps the
    # math identical while the output becomes a lane-dense (M/r, r*C4) slab
    # (row-major identical to (M, C4)) -> no masked partial stores.
    r = max(1, 128 // C4) if C4 < 128 else 1
    rCin, rC4 = r * Cin, r * C4

    # ---- generation-aware tile / VMEM sizing --------------------------------
    vmem_cap = _vmem_capacity_bytes()          # 64 MiB v7x, 128 MiB v5e/v6e
    vmem_usable = vmem_cap - (8 << 20)         # headroom for compiler scratch
    budget = int(0.6 * vmem_usable)            # keep double-buffering alive

    row_in_b, row_out_b, row_f32_b = rCin * in_b, rC4 * out_b, rC4 * 4
    w_bytes = rCin * rC4 * in_b
    tm = 8
    for cand in _TILE_CANDIDATES:
        if _apply_tile_footprint(cand, row_in_b, row_out_b, row_f32_b, w_bytes) <= budget:
            tm = cand
            break
    packed_rows = _cdiv(M, r)
    # Keep >= 2 grid steps when possible (pipelining + megacore sharding).
    while tm > 8 and _cdiv(packed_rows, tm) < 2:
        tm //= 2
    T = _cdiv(packed_rows, tm)
    mp_rows = T * tm
    M_pad = mp_rows * r

    if M_pad > M:
        # Zero rows contribute nothing to the Gram stats and their pass-2
        # outputs are sliced off below, so padding is exact.
        x2d = jnp.pad(x2d, ((0, M_pad - M), (0, 0)))
    xp = x2d.reshape(mp_rows, rCin)

    if r > 1:
        eye_r = jnp.eye(r, dtype=in_dtype)
        w_pack = (eye_r[:, None, :, None] * w_cat[None, :, None, :]).reshape(rCin, rC4)
    else:
        w_pack = w_cat

    # ---- pass 1: per-tile Gram-matrix partial statistics --------------------
    stats_bytes = (rCin * rCin + rCin) * 4
    vmem1 = _clamp_vmem(_stats_tile_footprint(tm, row_in_b, rCin, stats_bytes),
                        vmem_usable)
    gp, rp = pl.pallas_call(
        deconv_stats_kernel,
        out_shape=(jax.ShapeDtypeStruct((T, rCin, rCin), jnp.float32),
                   jax.ShapeDtypeStruct((T, 1, rCin), jnp.float32)),
        grid=(T,),
        in_specs=[pl.BlockSpec((tm, rCin), lambda i: (i, 0))],
        out_specs=(pl.BlockSpec((1, rCin, rCin), lambda i: (i, 0, 0)),
                   pl.BlockSpec((1, 1, rCin), lambda i: (i, 0, 0))),
        compiler_params=pltpu.CompilerParams(
            dimension_semantics=("parallel",),
            vmem_limit_bytes=vmem1),
        cost_estimate=pl.CostEstimate(
            flops=int(2 * mp_rows * rCin * rCin + mp_rows * rCin),
            transcendentals=0,
            bytes_accessed=int(mp_rows * rCin * in_b + T * stats_bytes)),
    )(xp)

    # ---- tiny wrapper-side fold of the partials -> per-channel scale/shift --
    w_cat_f32 = w_cat.astype(jnp.float32)        # same bf16 values the MXU saw
    gp_total = gp.sum(axis=0)                    # (rCin, rCin)
    rp_total = rp.sum(axis=(0, 1))               # (rCin,)
    idx = jnp.arange(r)
    g_full = gp_total.reshape(r, Cin, r, Cin)[idx, :, idx, :].sum(axis=0)  # (Cin,Cin)
    r_vec = rp_total.reshape(r, Cin).sum(axis=0)                           # (Cin,)

    sum_c4 = r_vec @ w_cat_f32                                  # (C4,)
    sumsq_c4 = jnp.sum(w_cat_f32 * (g_full @ w_cat_f32), axis=0)  # (C4,)

    count = 4.0 * M                               # N * 2H * 2W per channel
    sum_c = sum_c4.reshape(4, Cout).sum(axis=0)   # fold the 4 taps
    sumsq_c = sumsq_c4.reshape(4, Cout).sum(axis=0)
    mean = sum_c / count
    # E[y^2]-E[y]^2 (biased, training-mode); clamp guards f32 cancellation.
    var = jnp.maximum(sumsq_c / count - mean * mean, 0.0)
    scale_c = gamma.astype(jnp.float32) * jax.lax.rsqrt(var + EPS)
    shift_c = beta.astype(jnp.float32) - mean * scale_c
    # NOTE (v5e-only micro-opt from review): if the apply pass ever becomes
    # VALU/MXU-limited there, `scale` can be pre-folded into w_pack (one
    # Cin x 4Cout multiply) so the epilogue is y + shift; on v6e/v7x the FMA is
    # free filler under the memory bound, so it is kept for precision.
    scale_row = jnp.tile(scale_c, 4 * r).reshape(1, rC4)
    shift_row = jnp.tile(shift_c, 4 * r).reshape(1, rC4)

    # ---- pass 2: deconv matmul + fused BN affine + ReLU ---------------------
    vmem2 = _clamp_vmem(
        _apply_tile_footprint(tm, row_in_b, row_out_b, row_f32_b, w_bytes),
        vmem_usable)
    # NOTE: pipeline_mode=pl.Buffered(3) on the X block would deepen pipelining
    # if profiling shows exposed DMA at tile boundaries; left at the default
    # double-buffering since v7x VMEM headroom is the scarcer resource.
    yp = pl.pallas_call(
        deconv_apply_kernel,
        out_shape=jax.ShapeDtypeStruct((mp_rows, rC4), out_dtype),
        grid=(T,),
        in_specs=[
            pl.BlockSpec((tm, rCin), lambda i: (i, 0)),
            pl.BlockSpec((rCin, rC4), lambda i: (0, 0)),
            pl.BlockSpec((1, rC4), lambda i: (0, 0)),
            pl.BlockSpec((1, rC4), lambda i: (0, 0)),
        ],
        out_specs=pl.BlockSpec((tm, rC4), lambda i: (i, 0)),
        compiler_params=pltpu.CompilerParams(
            dimension_semantics=("parallel",),
            vmem_limit_bytes=vmem2),
        cost_estimate=pl.CostEstimate(
            flops=int(2 * mp_rows * rCin * rC4 + 3 * mp_rows * rC4),
            transcendentals=0,
            bytes_accessed=int(mp_rows * rCin * in_b + w_bytes + 2 * rC4 * 4
                               + mp_rows * rC4 * out_b)),
    )(xp, w_pack, scale_row, shift_row)

    # ---- reassemble (Mp/r, r*C4) -> (M, C4) -> (N, 2H, 2W, Cout) ------------
    y2d = yp.reshape(M_pad, C4)[:M]
    y_nhwc = (y2d.reshape(N, H, W, 2, 2, Cout)
                 .transpose(0, 1, 3, 2, 4, 5)
                 .reshape(N, 2 * H, 2 * W, Cout))
    if output_format == "NHWC":
        return y_nhwc
    return jnp.transpose(y_nhwc, (0, 3, 1, 2))


# ---------------------------------------------------------------------------
# Pure-JAX reference mirroring the PyTorch forward (training-mode BN)
# ---------------------------------------------------------------------------
def basic_deconv_up2_reference(x_nchw, w_iokk, gamma, beta):
    N, Cin, H, W = x_nchw.shape
    Cout = w_iokk.shape[1]
    # out[n, co, 2h+ky, 2w+kx] = sum_ci x[n,ci,h,w] * w[ci,co,ky,kx]
    y = jnp.einsum("nihw,iokl->nohkwl", x_nchw.astype(jnp.float32),
                   w_iokk.astype(jnp.float32))
    y = y.reshape(N, Cout, 2 * H, 2 * W)
    mean = jnp.mean(y, axis=(0, 2, 3), keepdims=True)
    var = jnp.mean(jnp.square(y - mean), axis=(0, 2, 3), keepdims=True)
    y = (y - mean) * jax.lax.rsqrt(var + EPS) * gamma.reshape(1, -1, 1, 1) \
        + beta.reshape(1, -1, 1, 1)
    return jnp.maximum(y, 0.0)


# ---------------------------------------------------------------------------
if __name__ == "__main__":
    key = jax.random.PRNGKey(0)
    kx, kw = jax.random.split(key)

    # Module defaults: out_channel = in_channel, scale = 2.
    N, Cin, H, W = 2, 4, 16, 16
    Cout = Cin

    x = jax.random.normal(kx, (N, Cin, H, W), jnp.float32)            # NCHW
    # ConvTranspose2d weight layout: (in_channel, out_channel, kH, kW), no bias.
    w = 0.25 * jax.random.normal(kw, (Cin, Cout, 2, 2), jnp.float32)
    gamma = jnp.ones((Cout,), jnp.float32)    # fresh BatchNorm2d affine defaults
    beta = jnp.zeros((Cout,), jnp.float32)

    out = jax.block_until_ready(basic_deconv_up2_pallas(x, w, gamma, beta))

    # Reference computed from the same bf16-quantised operands the kernel feeds
    # to the MXU, so the check isolates kernel logic from the (intentional)
    # bandwidth-saving bf16 input cast.
    x_q = x.astype(jnp.bfloat16).astype(jnp.float32)
    w_q = w.astype(jnp.bfloat16).astype(jnp.float32)
    ref = jax.block_until_ready(basic_deconv_up2_reference(x_q, w_q, gamma, beta))

    assert out.shape == (N, Cout, 2 * H, 2 * W)
    np.testing.assert_allclose(np.asarray(out), np.asarray(ref),
                               rtol=1e-3, atol=1e-3)
    print("KERNEL_OK")
</pallas_src>

<mosaic_0001>
module attributes {stable_mosaic.version = 11 : i64} {
  func.func @deconv_stats_kernel(%arg0: i32, %arg1: memref<32x32xbf16, #tpu.memory_space<vmem>>, %arg2: memref<1x32x32xf32, #tpu.memory_space<vmem>>, %arg3: memref<1x1x32xf32, #tpu.memory_space<vmem>>) attributes {dimension_semantics = [#tpu.dimension_semantics<parallel>], iteration_bounds = array<i64: 2>, scalar_prefetch = 0 : i64, scratch_operands = 0 : i64, tpu.core_type = #tpu.core_type<tc>, window_params = [{transform_indices = @transform_0, window_bounds = array<i64: 32, 32>}, {transform_indices = @transform_1, window_bounds = array<i64: 1, 32, 32>}, {transform_indices = @transform_2, window_bounds = array<i64: 1, 1, 32>}]} {
    %c0 = arith.constant 0 : index
    %c0_0 = arith.constant 0 : index
    %0 = vector.load %arg1[%c0, %c0_0] : memref<32x32xbf16, #tpu.memory_space<vmem>>, vector<32x32xbf16>
    %cst = arith.constant dense<0.000000e+00> : vector<32x32xf32>
    %1 = tpu.matmul %0, %0, %cst {dimension_numbers = #tpu.dot_dimension_numbers<[0], [0], [1], [1], [0, 1, 1, 1], [], []>} : vector<32x32xbf16>, vector<32x32xbf16>, vector<32x32xf32> -> vector<32x32xf32>
    %c0_1 = arith.constant 0 : index
    %c0_2 = arith.constant 0 : index
    %c0_3 = arith.constant 0 : index
    %2 = vector.load %arg2[%c0_1, %c0_2, %c0_3] : memref<1x32x32xf32, #tpu.memory_space<vmem>>, vector<1x32x32xf32>
    %3 = vector.shape_cast %2 : vector<1x32x32xf32> to vector<32x32xf32>
    %4 = vector.shape_cast %1 : vector<32x32xf32> to vector<1x32x32xf32>
    tpu.vector_store %arg2[%c0_1, %c0_2, %c0_3], %4 {strides = array<i32>} : memref<1x32x32xf32, #tpu.memory_space<vmem>>, vector<1x32x32xf32>,
    %5 = arith.extf %0 : vector<32x32xbf16> to vector<32x32xf32>
    %cst_4 = arith.constant dense<0.000000e+00> : vector<32xf32>
    %6 = vector.multi_reduction <add>, %5, %cst_4 [0] : vector<32x32xf32> to vector<32xf32>
    %7 = vector.shape_cast %6 : vector<32xf32> to vector<1x32xf32>
    %c0_5 = arith.constant 0 : index
    %c0_6 = arith.constant 0 : index
    %c0_7 = arith.constant 0 : index
    %8 = vector.load %arg3[%c0_5, %c0_6, %c0_7] : memref<1x1x32xf32, #tpu.memory_space<vmem>>, vector<1x1x32xf32>
    %9 = vector.shape_cast %8 : vector<1x1x32xf32> to vector<1x32xf32>
    %10 = vector.shape_cast %7 : vector<1x32xf32> to vector<1x1x32xf32>
    tpu.vector_store %arg3[%c0_5, %c0_6, %c0_7], %10 {strides = array<i32>} : memref<1x1x32xf32, #tpu.memory_space<vmem>>, vector<1x1x32xf32>,
    return
  }
  func.func @transform_0(%arg0: i32) -> (i32, i32) {
    %c0_i32 = arith.constant 0 : i32
    %c0_i32_0 = arith.constant 0 : i32
    return %arg0, %c0_i32 : i32, i32
  }
  func.func @transform_1(%arg0: i32) -> (i32, i32, i32) {
    %c0_i32 = arith.constant 0 : i32
    %c0_i32_0 = arith.constant 0 : i32
    %c0_i32_1 = arith.constant 0 : i32
    return %arg0, %c0_i32, %c0_i32_0 : i32, i32, i32
  }
  func.func @transform_2(%arg0: i32) -> (i32, i32, i32) {
    %c0_i32 = arith.constant 0 : i32
    %c0_i32_0 = arith.constant 0 : i32
    %c0_i32_1 = arith.constant 0 : i32
    return %arg0, %c0_i32, %c0_i32_0 : i32, i32, i32
  }
}

</mosaic_0001>

<llo_original>
// kernel: tpu_custom_call.1
$region0: #{tpu_custom_call.1}
  #allocation0 [shape = 'u32[]', space=smem, size = 0x4, offset = 0x4, fixed_abs, tag = 'smem constant byte address 0x4 - core index']
  #allocation1 [shape = 'u32[72,128]{1,0:T(1,128)}', space=vmem, size = 0x9000, scoped, tag = 'internal scratch']
  %s0 = inlined_call_operand.vmem [shape: bf16[64,32], index: 0, kind: input, shape index: {}]
  %s1 = inlined_call_operand.hbm [shape: f32[2,32,32], index: 1, kind: output, shape index: {0}]
  %s2 = inlined_call_operand.hbm [shape: f32[2,1,32], index: 2, kind: output, shape index: {1}]
  %3 = xla_tuple %s1, %s2
  %s4 = sld [smem:[#allocation0]]
  $region45: #{tpu_custom_call.1} parent=0
    _
  %s6 = ssub.s32 1, %s4
  %s7 = scalar_select 0, %s6, %s4
  $region1: #{tpu_custom_call.1} parent=0
    #allocation2 [shape = 'u8[32768]{0}', space=vmem, size = 0x8000, scoped, tag = 'output window, operand 0']
    #allocation3 [shape = 's32[2]{0}', space=sflag, size = 0x8, scoped, tag = 'scoped memory for tpu_custom_call.1']
    #allocation4 [shape = 'u8[1024]{0}', space=vmem, size = 0x400, scoped, tag = 'output window, operand 1']
    #allocation5 [shape = 's32[2]{0}', space=sflag, size = 0x8, scoped, tag = 'scoped memory for tpu_custom_call.1']
    %8 = vsyncpa [#allocation3], 0
    %s9 = scalar_lea.sflag [#allocation3], 1
    %10 = vsyncpa %s9, 0
    %11 = vsyncpa [#allocation5], 0
    %s12 = scalar_lea.sflag [#allocation5], 1
    %13 = vsyncpa %s12, 0
    loop: start=0, step=1, limit=4
    $region2: #{tpu_custom_call.1} parent=1 // loop_pre_header
      _
    $region3: #{tpu_custom_call.1} parent=1 // loop_header
      %s15 = sphi 0, %s19
      %p16 = scmp.ge.s32.totalorder %s15, 4
      %s25 = sphi 0, %s27
      %s28 = sphi 0, %s25
      %s29 = sphi 0, %s28
      %s45 = sphi 0, %s29
      %s51 = sphi 0, %s53
      %s54 = sphi 0, %s51
      %s55 = sphi 0, %s54
      %s71 = sphi 0, %s55
      %s77 = sphi 0, %s79
      %s80 = sphi 0, %s77
      %s81 = sphi 0, %s80
      %s97 = sphi 0, %s81
    $region4: #{tpu_custom_call.1} parent=1 // loop_header_branch
      %18 = sbr.rel (%p16) target = $region8
    $region5: #{tpu_custom_call.1} parent=1 // loop_body
      %s20 = ssub.s32 %s15, 1
      %s21 = ssub.s32 %s15, 2
      %s22 = sadd.s32 %s15, 1
      %s23 = ssub.s32 %s15, %s22
      %p24 = scmp.eq.s32.totalorder %s23, 0
      %s26 = sadd.s32 %s25, 1
      %s27 = scalar_select %p24, %s25, %s26
      %p30 = pneg %p24
      %p31 = scmp.eq.s32.totalorder %s15, 1
      %p32 = por %p30, %p31
      %p33 = scmp.ne.s32.totalorder %s25, %s28
      %p34 = scmp.eq.s32.totalorder %s15, 0
      %p35 = por %p33, %p34
      %p36 = scmp.ne.s32.totalorder %s25, %s28
      %p37 = scmp.eq.s32.totalorder %s20, 1
      %p38 = por %p36, %p37
      %p39 = scmp.ne.s32.totalorder %s28, %s29
      %p40 = scmp.eq.s32.totalorder %s20, 0
      %p41 = por %p39, %p40
      %p42 = scmp.ne.s32.totalorder %s28, %s29
      %p43 = scmp.eq.s32.totalorder %s21, 1
      %p44 = por %p42, %p43
      %p46 = scmp.ne.s32.totalorder %s29, %s45
      %p47 = scmp.eq.s32.totalorder %s21, 0
      %p48 = por %p46, %p47
      %s49 = ssub.s32 %s15, %s22
      %p50 = scmp.eq.s32.totalorder %s49, 0
      %s52 = sadd.s32 %s51, 1
      %s53 = scalar_select %p50, %s51, %s52
      %p56 = pneg %p50
      %p57 = scmp.eq.s32.totalorder %s15, 1
      %p58 = por %p56, %p57
      %p59 = scmp.ne.s32.totalorder %s51, %s54
      %p60 = scmp.eq.s32.totalorder %s15, 0
      %p61 = por %p59, %p60
      %p62 = scmp.ne.s32.totalorder %s51, %s54
      %p63 = scmp.eq.s32.totalorder %s20, 1
      %p64 = por %p62, %p63
      %p65 = scmp.ne.s32.totalorder %s54, %s55
      %p66 = scmp.eq.s32.totalorder %s20, 0
      %p67 = por %p65, %p66
      %p68 = scmp.ne.s32.totalorder %s54, %s55
      %p69 = scmp.eq.s32.totalorder %s21, 1
      %p70 = por %p68, %p69
      %p72 = scmp.ne.s32.totalorder %s55, %s71
      %p73 = scmp.eq.s32.totalorder %s21, 0
      %p74 = por %p72, %p73
      %s75 = ssub.s32 %s15, %s22
      %p76 = scmp.eq.s32.totalorder %s75, 0
      %s78 = sadd.s32 %s77, 1
      %s79 = scalar_select %p76, %s77, %s78
      %p82 = pneg %p76
      %p83 = scmp.eq.s32.totalorder %s15, 1
      %p84 = por %p82, %p83
      %p85 = scmp.ne.s32.totalorder %s77, %s80
      %p86 = scmp.eq.s32.totalorder %s15, 0
      %p87 = por %p85, %p86
      %p88 = scmp.ne.s32.totalorder %s77, %s80
      %p89 = scmp.eq.s32.totalorder %s20, 1
      %p90 = por %p88, %p89
      %p91 = scmp.ne.s32.totalorder %s80, %s81
      %p92 = scmp.eq.s32.totalorder %s20, 0
      %p93 = por %p91, %p92
      %p94 = scmp.ne.s32.totalorder %s80, %s81
      %p95 = scmp.eq.s32.totalorder %s21, 1
      %p96 = por %p94, %p95
      %p98 = scmp.ne.s32.totalorder %s81, %s97
      %p99 = scmp.eq.s32.totalorder %s21, 0
      %p100 = por %p98, %p99
      %p101 = scmp.le.s32.totalorder 1, %s15
      %p102 = scmp.lt.s32.totalorder %s15, 3
      %p103 = pnand %p101, %p102
      %p104 = pneg %p103
      // Predicated region
      $region9: #{tpu_custom_call.1} parent=5 // pred_check
        _
      $region10: #{tpu_custom_call.1} parent=5 // pred_check_branch
        %106 = sbr.rel (%p103) target = $region12
      $region11: #{tpu_custom_call.1} parent=5 // pred_region
        %s107 = ssub.s32 %s15, 1
      $region12: #{tpu_custom_call.1} parent=5 // pred_fallthru
        _
      %p108 = scmp.lt.s32.totalorder %s15, 2
      // Predicated region
      $region13: #{tpu_custom_call.1} parent=5 // pred_check
        %p109 = pneg %p108
      $region14: #{tpu_custom_call.1} parent=5 // pred_check_branch
        %111 = sbr.rel (%p109) target = $region16
      $region15: #{tpu_custom_call.1} parent=5 // pred_region
        // Predicated region
        $region17: #{tpu_custom_call.1} parent=15 // pred_check
          %p112 = pneg %p35
        $region18: #{tpu_custom_call.1} parent=15 // pred_check_branch
          %114 = sbr.rel (%p112) target = $region20
        $region19: #{tpu_custom_call.1} parent=15 // pred_region
          %s115 = smul.u32 4, %s15
          %p116 = scmp.lt.s32.totalorder %s115, 7
          %s117 = scalar_select %p116, %s115, 7
          %s118 = smul.addr %s117, 4
          %s119 = scalar_lea.vmem %s0, %s118
          %s120 = smul.u32 4, %s15
        $region20: #{tpu_custom_call.1} parent=15 // pred_fallthru
          _
      $region16: #{tpu_custom_call.1} parent=5 // pred_fallthru
        _
      %p121 = scmp.le.s32.totalorder 1, %s15
      %p122 = scmp.lt.s32.totalorder %s15, 3
      %p123 = pnand %p121, %p122
      %p124 = pneg %p123
      // Predicated region
      $region21: #{tpu_custom_call.1} parent=5 // pred_check
        _
      $region22: #{tpu_custom_call.1} parent=5 // pred_check_branch
        %126 = sbr.rel (%p123) target = $region24
      $region23: #{tpu_custom_call.1} parent=5 // pred_region
        %s127 = ssub.s32 %s15, 1
        %s128 = smul.u32 4, %s20
        %p129 = scmp.lt.s32.totalorder %s128, 7
        %s130 = scalar_select %p129, %s128, 7
        %s131 = smul.addr %s130, 4
        %s132 = scalar_lea.vmem %s0, %s131
        %p133 = pneg %p41
        %p134 = pneg %p38
        %p135 = pneg %p67
        %p136 = pneg %p64
        %s137 = sand.u32 %s54, 1
        %s138 = scalar_lea.sflag [#allocation3], %s137
        %s139 = sand.u32 %s54, 1
        %s140 = smul.addr %s139, 32
        %s141 = scalar_lea.vmem [#allocation2], %s140
        %p142 = pneg %p93
        %p143 = pneg %p90
        %s144 = sand.u32 %s80, 1
        %s145 = scalar_lea.sflag [#allocation5], %s144
        %s146 = sand.u32 %s80, 1
        %s147 = scalar_lea.vmem [#allocation4], %s146
        %s148 = smul.u32 4, %s20
        %p149 = scmp.lt.s32.totalorder %s148, 7
        %s150 = scalar_select %p149, %s148, 7
        %s151 = smul.addr %s150, 4
        %s152 = scalar_lea.vmem %s0, %s151
        %s153 = smul.u32 4, %s20
        %v155 = vld [vmem:[%s152] sm:$0xf]
        %v156 = vld [vmem:[%s152 + $0x4] sm:$0xf]
        %v157 = vld [vmem:[%s152 + $0x8] sm:$0xf]
        %v158 = vld [vmem:[%s152 + $0xc] sm:$0xf]
        %v163 = vunpack.c.l.b16 %v155
        %v164 = vunpack.c.l.b16 %v156
        %v165 = vunpack.c.l.b16 %v157
        %v166 = vunpack.c.l.b16 %v158
        %v167 = vpack.c.b16 %v164, %v163
        %v168 = vpack.c.b16 %v166, %v165
        %171 = vxpose.xlu0.c.b16.start [1/8] %v167, 128
        %172 = vxpose.xlu0.c.b16.cont [2/8] %v168, 128
        %173 = vxpose.xlu0.c.b16.cont [3/8] 0, 128
        %174 = vxpose.xlu0.c.b16.cont [4/8] 0, 128
        %175 = vxpose.xlu0.c.b16.cont [5/8] 0, 128
        %176 = vxpose.xlu0.c.b16.cont [6/8] 0, 128
        %177 = vxpose.xlu0.c.b16.cont [7/8] 0, 128
        %178 = vxpose.xlu0.c.b16.end [8/8] 0, 128
        %v179 = vpop.trf.xlu0
        %v180 = vpop.trf.xlu0
        %v181 = vpop.trf.xlu0
        %v182 = vpop.trf.xlu0
        %v183 = vpop.trf.xlu0
        %v184 = vpop.trf.xlu0
        %v185 = vpop.trf.xlu0
        %v186 = vpop.trf.xlu0
        %vm187 = vcmask 261120
        %v189 = vsel %vm187, %v179, 0
        %v192 = vsel %vm187, %v180, 0
        %194 = vmatpush.bf16.msra.mxu0 0
        %195 = vmatpush.bf16.msra.mxu0 0
        %196 = vmatpush.bf16.msra.mxu0 0
        %197 = vmatpush.bf16.msra.mxu0 0
        %198 = vmatpush.bf16.msra.mxu0 0
        %199 = vmatpush.bf16.msra.mxu0 0
        %200 = vmatpush.bf16.msra.mxu0 %v168
        %201 = vmatpush.bf16.msra.mxu0 %v167
        %202 = vmatmul.bf16.gmra.mxu0 %v189
        %v203 = vpop.f32.mrf.mxu0
        %v204 = vadd.f32 0.0, %v203
        %v205 = vpop.f32.mrf.mxu0
        %v206 = vadd.f32 0.0, %v205
        %207 = vmatmul.bf16.gmra.mxu0 %v192
        %v208 = vpop.f32.mrf.mxu0
        %v209 = vadd.f32 0.0, %v208
        %v210 = vpop.f32.mrf.mxu0
        %v211 = vadd.f32 0.0, %v210
        %212 = vdwg.mxu0
        %213 = vst.msk [vmem:[%s141] sm:$0xff] %vm187, %v204
        %214 = vst.msk [vmem:[%s141 + $0x8] sm:$0xff] %vm187, %v206
        %215 = vst.msk [vmem:[%s141 + $0x10] sm:$0xff] %vm187, %v209
        %216 = vst.msk [vmem:[%s141 + $0x18] sm:$0xff] %vm187, %v211
        %v217 = vunpack.c.l.bf16 %v155
        %v218 = vunpack.c.l.bf16 %v156
        %v219 = vunpack.c.l.bf16 %v157
        %v220 = vunpack.c.l.bf16 %v158
        %v221 = vsel %vm187, %v217, 0.0
        %v222 = vsel %vm187, %v218, 0.0
        %v223 = vadd.f32 %v221, %v222
        %v224 = vsel %vm187, %v219, 0.0
        %v225 = vadd.f32 %v223, %v224
        %v226 = vsel %vm187, %v220, 0.0
        %v227 = vadd.f32 %v225, %v226
        %v228 = vrot.slane %v227, 4
        %v229 = vadd.f32 %v227, %v228
        %v230 = vrot.slane %v229, 2
        %v231 = vadd.f32 %v229, %v230
        %v232 = vrot.slane %v231, 1
        %v233 = vadd.f32 %v231, %v232
        %vm234 = vcmask 253952
        %235 = vst.msk [vmem:[%s147] sm:$0x1] %vm234, %v233
        %s236 = sand.u32 %s54, 1
        %s237 = scalar_lea.sflag [#allocation3], %s236
        %s238 = sand.u32 %s54, 1
        %s239 = smul.addr %s238, 32
        %s240 = scalar_lea.vmem [#allocation2], %s239
        %s241 = sand.u32 %s80, 1
        %s242 = scalar_lea.sflag [#allocation5], %s241
        %s243 = sand.u32 %s80, 1
        %s244 = scalar_lea.vmem [#allocation4], %s243
        // Predicated region
        $region25: #{tpu_custom_call.1} parent=23 // pred_check
          %p245 = pneg %p64
        $region26: #{tpu_custom_call.1} parent=23 // pred_check_branch
          %247 = sbr.rel (%p245) target = $region28
        $region27: #{tpu_custom_call.1} parent=23 // pred_region
          %249 = vsyncadd %s237, 0
          %s250 = smul.addr %s20, 4
          %s251 = smul.addr %s250, 8
          %s252 = scalar_lea.hbm %s1, %s251
          %s253 = sshll.u32 %s240, 4
          %s254 = int_to_ptr.vmem [resolvable:$true] %s253
          %s255 = sshll.u32 %s252, 4
          %s256 = int_to_ptr.hbm [resolvable:$true] %s255
          %261 = dma.vmem_to_hbm [thread:$0]  %s254, 512, %s256, %s237, 128, 128, 8
        $region28: #{tpu_custom_call.1} parent=23 // pred_fallthru
          _
        // Predicated region
        $region29: #{tpu_custom_call.1} parent=23 // pred_check
          %p262 = pneg %p90
        $region30: #{tpu_custom_call.1} parent=23 // pred_check_branch
          %264 = sbr.rel (%p262) target = $region32
        $region31: #{tpu_custom_call.1} parent=23 // pred_region
          %266 = vsyncadd %s242, 0
          %s267 = scalar_lea.hbm %s2, %s20
          %s269 = sshll.u32 %s244, 4
          %s270 = int_to_ptr.vmem [resolvable:$true] %s269
          %s271 = sshll.u32 %s267, 4
          %s272 = int_to_ptr.hbm [resolvable:$true] %s271
          %274 = dma.vmem_to_hbm [thread:$0]  %s270, 16, %s272, %s242
        $region32: #{tpu_custom_call.1} parent=23 // pred_fallthru
          _
      $region24: #{tpu_custom_call.1} parent=5 // pred_fallthru
        _
      %p275 = scmp.le.s32.totalorder 2, %s15
      // Predicated region
      $region33: #{tpu_custom_call.1} parent=5 // pred_check
        %p276 = pneg %p275
      $region34: #{tpu_custom_call.1} parent=5 // pred_check_branch
        %278 = sbr.rel (%p276) target = $region36
      $region35: #{tpu_custom_call.1} parent=5 // pred_region
        %s279 = ssub.s32 %s15, 2
        // Predicated region
        $region37: #{tpu_custom_call.1} parent=35 // pred_check
          %p280 = pneg %p70
        $region38: #{tpu_custom_call.1} parent=35 // pred_check_branch
          %282 = sbr.rel (%p280) target = $region40
        $region39: #{tpu_custom_call.1} parent=35 // pred_region
          %s283 = sand.u32 %s55, 1
          %s284 = scalar_lea.sflag [#allocation3], %s283
          %s285 = sand.u32 %s55, 1
          %s286 = smul.addr %s285, 32
          %s287 = scalar_lea.vmem [#allocation2], %s286
          %289 = dma.done %s284, 512
        $region40: #{tpu_custom_call.1} parent=35 // pred_fallthru
          _
        // Predicated region
        $region41: #{tpu_custom_call.1} parent=35 // pred_check
          %p290 = pneg %p96
        $region42: #{tpu_custom_call.1} parent=35 // pred_check_branch
          %292 = sbr.rel (%p290) target = $region44
        $region43: #{tpu_custom_call.1} parent=35 // pred_region
          %s293 = sand.u32 %s81, 1
          %s294 = scalar_lea.sflag [#allocation5], %s293
          %s295 = sand.u32 %s81, 1
          %s296 = scalar_lea.vmem [#allocation4], %s295
          %298 = dma.done %s294, 16
        $region44: #{tpu_custom_call.1} parent=35 // pred_fallthru
          _
      $region36: #{tpu_custom_call.1} parent=5 // pred_fallthru
        _
    $region6: #{tpu_custom_call.1} parent=1 // loop_footer
      %s19 = sadd.s32 1, %s15
    $region7: #{tpu_custom_call.1} parent=1 // loop_footer_branch
      %14 = sbr.rel target = $region3
    $region8: #{tpu_custom_call.1} parent=1 // loop_exit
      _
    %299 = vsyncpa [#allocation3], 1
    %s300 = scalar_lea.sflag [#allocation3], 1
    %301 = vsyncpa %s300, 1
    %302 = vsyncpa [#allocation5], 1
    %s303 = scalar_lea.sflag [#allocation5], 1
    %304 = vsyncpa %s303, 1

</llo_original>
